<compile_context>
chip_gen: v7x
topology: tpu7x:2x2x1
jax: 0.10.0
libtpu: 0.0.40
codegen_flags: <defaults>
</compile_context>

<pallas_src>
import jax
import jax.numpy as jnp
from jax import lax
from jax.experimental import pallas as pl
from jax.experimental.pallas import tpu as pltpu


# ----------------------------------------------------------------------------
# Small helpers
# ----------------------------------------------------------------------------
def _round_up(x, m):
    return ((x + m - 1) // m) * m


def _pad2d(m, rows, cols):
    r, c = m.shape
    return jnp.pad(m, ((0, rows - r), (0, cols - c)))


def _pack_slab(blocks):
    """Pack named 2D f32 blocks into one slab.

    Every block's row offset is a multiple of 8 and its lane offset a multiple
    of 128, so each in-kernel `slab_ref[r:r+nr, c:c+nc]` slice is a zero-copy
    (8,128)-tile-aligned view.  Blocks with <=128 lanes are placed side-by-side
    into 128-lane banks to keep the slab (and its single DMA) small.

    Returns (slab, offs) where offs[name] = (row, col, nrows, ncols).
    """
    widths = [int(m.shape[1]) for _, m in blocks]
    wp = _round_up(max(widths), 128)
    n_banks = wp // 128
    bank_rows = [0] * n_banks
    placed, offs, wide = [], {}, []

    for name, m in blocks:
        m = jnp.asarray(m, jnp.float32)
        r, c = m.shape
        if c > 128:
            wide.append((name, m))
            continue
        b = min(range(n_banks), key=lambda i: bank_rows[i])
        row, col = bank_rows[b], b * 128
        placed.append((name, m, row, col))
        offs[name] = (row, col, r, c)
        bank_rows[b] = row + _round_up(r, 8)

    base = max(bank_rows)
    for name, m in wide:
        r, c = m.shape
        placed.append((name, m, base, 0))
        offs[name] = (base, 0, r, c)
        base += _round_up(r, 8)

    slab = jnp.zeros((max(base, 8), wp), jnp.float32)
    for name, m, row, col in placed:
        slab = slab.at[row:row + m.shape[0], col:col + m.shape[1]].set(m)
    return slab, offs


# ----------------------------------------------------------------------------
# Wrapper-side packing (layout plumbing only; in production pack_params runs
# once per checkpoint, not per call)
# ----------------------------------------------------------------------------
def pack_params(params, hidden, num_bs, n_ue, n_bs):
    (w_ue, b_ue, g_ue, be_ue, w_bs, b_bs, g_bs, be_bs,
     wa1_ue, wa1_bs, wa1_snr, ba1, wa2, ba2,
     wd1_ue, wd1_bs, wd1_snr, bd1, wd2, bd2,
     wc, bc, wr1, br1, wr2, br2) = [jnp.asarray(x, jnp.float32) for x in params]
    H = hidden
    NBH = n_bs * H
    NC = num_bs + 1
    NCP = _round_up(NC, 128)            # regressor-hidden cols start lane-aligned
    n_ue_p = _round_up(n_ue, 8)
    n_bs_p = _round_up(n_bs, 8)

    # fused encoder: stacked [ue|0 ; 0|bs] rows, per-row bias / LN parameters
    enc_w = jnp.concatenate([w_ue, w_bs], axis=0)                     # (UE+BS, H)
    stack = lambda u, b: jnp.concatenate(
        [jnp.broadcast_to(u, (n_ue_p, H)), jnp.broadcast_to(b, (n_bs_p, H))], axis=0)

    # fused per-side projections (attention part pre-tiled flat | decoder part)
    ue_proj = jnp.concatenate([jnp.tile(wa1_ue, (1, n_bs)), wd1_ue], axis=1)  # (H, NBH+H)
    bs_proj = jnp.concatenate([jnp.tile(wa1_bs, (1, n_bs)), wd1_bs], axis=1)  # (H, NBH+H)
    # constant mask selecting the diagonal (j'==j) blocks of the tiled bs projection
    blockmask = jnp.kron(jnp.eye(n_bs, dtype=jnp.float32),
                         jnp.ones((1, H), jnp.float32))                       # (n_bs, NBH)
    # SNR term as one MXU matmul: snr @ kron(eye(n_bs), wa1_snr)
    snr_expand = jnp.kron(jnp.eye(n_bs, dtype=jnp.float32), wa1_snr)          # (n_bs, NBH)
    ba1_flat = jnp.tile(ba1, (1, n_bs))                                       # (1, NBH)
    # block-diagonal second attention Linear(H->1): raw scores via one matmul.
    # (ba2 is intentionally dropped: a per-row constant never changes argmax.)
    w2blk = jnp.kron(jnp.eye(n_bs, dtype=jnp.float32), wa2.T)                 # (NBH, n_bs)
    # fused heads: [classifier (padded to 128 lanes) | regressor hidden]
    head_w = jnp.concatenate([_pad2d(wc, H // 2, NCP), wr1], axis=1)          # (H/2, NCP+H/4)
    head_b = jnp.concatenate([_pad2d(bc, 1, NCP), br1], axis=1)               # (1, NCP+H/4)

    blocks = [
        ("enc_w", enc_w),
        ("enc_b", stack(b_ue, b_bs)),
        ("enc_g", stack(g_ue, g_bs)),
        ("enc_be", stack(be_ue, be_bs)),
        ("ue_proj", ue_proj), ("bs_proj", bs_proj),
        ("blockmask", blockmask), ("snr_expand", snr_expand), ("ba1_flat", ba1_flat),
        ("w2blk", w2blk),
        ("wd1_snr", wd1_snr), ("bd1", bd1), ("wd2", wd2), ("bd2", bd2),
        ("head_w", head_w), ("head_b", head_b),
        ("wr2", wr2), ("br2", br2),
    ]
    # TODO(synk): a bf16 weight slab would halve this DMA; kept f32 so argmax
    # agrees bit-exactly with the f32 reference.
    return _pack_slab(blocks)


def pack_acts(ue_state, bs_state, distances, snr_db):
    n_ue, ue_dim = ue_state.shape
    n_bs, bs_dim = bs_state.shape
    n_ue_p = _round_up(n_ue, 8)
    n_bs_p = _round_up(n_bs, 8)
    # stacked encoder input: [ue | 0] rows then [0 | bs] rows (8-row aligned groups)
    enc_in = jnp.zeros((n_ue_p + n_bs_p, ue_dim + bs_dim), jnp.float32)
    enc_in = enc_in.at[:n_ue, :ue_dim].set(ue_state.astype(jnp.float32))
    enc_in = enc_in.at[n_ue_p:n_ue_p + n_bs, ue_dim:].set(bs_state.astype(jnp.float32))
    blocks = [
        ("enc_in", enc_in),
        ("dist", distances.astype(jnp.float32)),
        ("maxdist", bs_state[:, 4][None, :].astype(jnp.float32)),
        ("snr", snr_db.astype(jnp.float32)),
        ("maxbw", ue_state[:, 4][:, None].astype(jnp.float32)),
    ]
    return _pack_slab(blocks)


# ----------------------------------------------------------------------------
# Pallas kernel: the entire AllocatorNN forward pass (single invocation)
# ----------------------------------------------------------------------------
def make_kernel(n_ue, n_bs, hidden, num_bs, p_offs, a_offs):
    H = hidden
    NBH = n_bs * H
    NC = num_bs + 1
    NCP = _round_up(NC, 128)
    H4 = H // 4
    n_ue_p = _round_up(n_ue, 8)
    eps = 1e-5

    def kernel(act_ref, wp_ref, out_ref):
        def pblk(name):
            r, c, nr, nc = p_offs[name]
            return wp_ref[r:r + nr, c:c + nc]       # static, (8,128)-aligned view

        def ablk(name):
            r, c, nr, nc = a_offs[name]
            return act_ref[r:r + nr, c:c + nc]

        enc_in = ablk("enc_in")                     # (n_ue_p+n_bs_p, UE+BS)
        dist = ablk("dist")                         # (n_ue, n_bs)
        max_dist = ablk("maxdist")                  # (1, n_bs)
        snr = ablk("snr")                           # (n_ue, n_bs)
        max_bw = ablk("maxbw")                      # (n_ue, 1)

        # --- fused encoders: one MXU matmul for ue + bs pre-activations ------
        h = jnp.maximum(
            jnp.dot(enc_in, pblk("enc_w"), preferred_element_type=jnp.float32)
            + pblk("enc_b"), 0.0)                   # (n_enc, H)
        # LayerNorm with independent reductions (var = E[x^2] - mu^2)
        s1 = jnp.sum(h, axis=-1, keepdims=True)
        s2 = jnp.sum(h * h, axis=-1, keepdims=True)
        mu = s1 * (1.0 / H)
        var = s2 * (1.0 / H) - mu * mu
        enc_f = (h - mu) * lax.rsqrt(var + eps) * pblk("enc_g") + pblk("enc_be")

        ue_f = enc_f[0:n_ue, :]                     # 8-row-aligned sublane slices
        bs_f = enc_f[n_ue_p:n_ue_p + n_bs, :]

        # --- fused shared-LHS projections -------------------------------------
        ue_full = jnp.dot(ue_f, pblk("ue_proj"), preferred_element_type=jnp.float32)
        ue_a_flat = ue_full[:, 0:NBH]               # (n_ue, N_bs*H), flat layout
        ue_d = ue_full[:, NBH:NBH + H]              # (n_ue, H), lane offset 128-aligned
        bs_full = jnp.dot(bs_f, pblk("bs_proj"), preferred_element_type=jnp.float32)
        bs_tiled = bs_full[:, 0:NBH]                # (n_bs, N_bs*H): row j' = bs_a[j'] tiled
        bs_d = bs_full[:, NBH:NBH + H]              # (n_bs, H)

        # flat broadcast row of the bs attention term: pick diagonal blocks,
        # one sublane reduction (no reshape / per-row concats)
        bs_a_flat = jnp.sum(bs_tiled * pblk("blockmask"), axis=0, keepdims=True)

        # --- pairwise attention MLP, flat (n_ue, N_bs*H) layout ---------------
        snr_term = jnp.dot(snr, pblk("snr_expand"), preferred_element_type=jnp.float32)
        h_a = jnp.maximum(ue_a_flat + bs_a_flat + snr_term + pblk("ba1_flat"), 0.0)

        # raw scores (softmax and ba2 dropped: argmax-invariant)
        scores = jnp.dot(h_a, pblk("w2blk"), preferred_element_type=jnp.float32)
        scores = scores + jnp.where(dist > max_dist, jnp.float32(-1e9), jnp.float32(0.0))

        # argmax (min-index tie-break, matches jnp/torch argmax); kept as
        # max + where + min since that lowers portably in Mosaic
        col = lax.broadcasted_iota(jnp.int32, scores.shape, 1)
        smax = jnp.max(scores, axis=1, keepdims=True)
        best = jnp.min(jnp.where(scores == smax, col, n_bs), axis=1, keepdims=True)
        one_hot = (col == best).astype(jnp.float32)                       # (n_ue, n_bs)

        best_snr = jnp.sum(one_hot * snr, axis=1, keepdims=True)          # (n_ue, 1)
        # weighted_bs @ wd1_bs == one_hot @ (bs_f @ wd1_bs)
        bs_d_sel = jnp.dot(one_hot, bs_d, preferred_element_type=jnp.float32)

        # --- decoder + fused heads --------------------------------------------
        x1 = jnp.maximum(ue_d + bs_d_sel + best_snr * pblk("wd1_snr") + pblk("bd1"), 0.0)
        x2 = jnp.maximum(jnp.dot(x1, pblk("wd2"), preferred_element_type=jnp.float32)
                         + pblk("bd2"), 0.0)                              # (n_ue, H/2)

        head = jnp.dot(x2, pblk("head_w"), preferred_element_type=jnp.float32) + pblk("head_b")
        logits = head[:, 0:NC]
        ccol = lax.broadcasted_iota(jnp.int32, logits.shape, 1)
        lmax = jnp.max(logits, axis=1, keepdims=True)
        best_cls = jnp.min(jnp.where(logits == lmax, ccol, NC), axis=1, keepdims=True)
        assign = (best_cls - 1).astype(jnp.float32)                       # exact small ints

        r = jnp.maximum(head[:, NCP:NCP + H4], 0.0)                       # lane-aligned slice
        bw_ratio = jax.nn.sigmoid(
            jnp.dot(r, pblk("wr2"), preferred_element_type=jnp.float32) + pblk("br2"))
        bw = jnp.minimum(bw_ratio * max_bw, max_bw)

        # merged output: col 0 = assignment (as f32), col 1 = bandwidth
        # TODO(synk): when batched over scenarios / large N_ue, write into a
        # lane-padded (128-wide) output to avoid masked partial stores.
        out_ref[...] = jnp.concatenate([assign, bw], axis=1)

    return kernel


# ----------------------------------------------------------------------------
# Wrapper
# ----------------------------------------------------------------------------
def allocator_forward(ue_state, bs_state, distances, snr_db, params):
    n_ue = ue_state.shape[0]
    n_bs = bs_state.shape[0]
    hidden = params[0].shape[1]
    num_bs = params[20].shape[1] - 1              # wc: (H/2, num_bs+1)

    wpack, p_offs = pack_params(params, hidden, num_bs, n_ue, n_bs)
    apack, a_offs = pack_acts(ue_state, bs_state, distances, snr_db)

    kernel = make_kernel(n_ue, n_bs, hidden, num_bs, p_offs, a_offs)
    out = pl.pallas_call(
        kernel,
        out_shape=jax.ShapeDtypeStruct((n_ue, 2), jnp.float32),
        in_specs=[pl.BlockSpec(memory_space=pltpu.MemorySpace.VMEM),
                  pl.BlockSpec(memory_space=pltpu.MemorySpace.VMEM)],
        out_specs=pl.BlockSpec(memory_space=pltpu.MemorySpace.VMEM),
    )(apack, wpack)
    # TODO(synk): if this is ever batched over scenarios / large N_ue, add a
    # leading grid axis with dimension_semantics=("parallel",) so v7x's two
    # TensorCores share the work, keep row tiles sized for v7x's 64 MiB VMEM,
    # and batch rows so the MXU M dimension reaches >=128.
    return out[:, 0].astype(jnp.int32), out[:, 1]


# ----------------------------------------------------------------------------
# Deterministic parameter init (synthetic; matches shapes in __init__)
# ----------------------------------------------------------------------------
def init_params(key, ue_dim, bs_dim, hidden, num_bs):
    H = hidden
    ks = list(jax.random.split(key, 32))
    nk = iter(ks)

    def w(shape, scale=0.2):
        return (scale * jax.random.normal(next(nk), shape)).astype(jnp.float32)

    params = (
        # ue encoder
        w((ue_dim, H)), w((1, H), 0.05), jnp.ones((1, H), jnp.float32), jnp.zeros((1, H), jnp.float32),
        # bs encoder
        w((bs_dim, H)), w((1, H), 0.05), jnp.ones((1, H), jnp.float32), jnp.zeros((1, H), jnp.float32),
        # attention (Linear 2H+1 -> H split, then H -> 1 stored as (1, H))
        w((H, H)), w((H, H)), w((1, H)), w((1, H), 0.05), w((1, H)), w((1, 1), 0.05),
        # decoder (Linear 2H+1 -> H split, then H -> H/2)
        w((H, H)), w((H, H)), w((1, H)), w((1, H), 0.05), w((H, H // 2)), w((1, H // 2), 0.05),
        # bs classifier
        w((H // 2, num_bs + 1)), w((1, num_bs + 1), 0.05),
        # bw regressor
        w((H // 2, H // 4)), w((1, H // 4), 0.05), w((H // 4, 1)), w((1, 1), 0.05),
    )
    return params


# ----------------------------------------------------------------------------
# Pure-JAX reference (mirrors the PyTorch forward) for a sanity check
# ----------------------------------------------------------------------------
def reference_forward(ue_state, bs_state, distances, snr_db, p):
    (w_ue, b_ue, g_ue, be_ue, w_bs, b_bs, g_bs, be_bs,
     wa1_ue, wa1_bs, wa1_snr, ba1, wa2, ba2,
     wd1_ue, wd1_bs, wd1_snr, bd1, wd2, bd2,
     wc, bc, wr1, br1, wr2, br2) = p

    def ln(x, g, b):
        mu = x.mean(-1, keepdims=True)
        var = ((x - mu) ** 2).mean(-1, keepdims=True)
        return (x - mu) / jnp.sqrt(var + 1e-5) * g + b

    ue_f = ln(jax.nn.relu(ue_state @ w_ue + b_ue), g_ue, be_ue)
    bs_f = ln(jax.nn.relu(bs_state @ w_bs + b_bs), g_bs, be_bs)
    n_ue, n_bs = distances.shape
    H = ue_f.shape[1]

    wa1 = jnp.concatenate([wa1_ue, wa1_bs, wa1_snr], axis=0)     # (2H+1, H)
    combined = jnp.concatenate(
        [jnp.broadcast_to(ue_f[:, None, :], (n_ue, n_bs, H)),
         jnp.broadcast_to(bs_f[None, :, :], (n_ue, n_bs, H)),
         snr_db[:, :, None]], axis=-1)
    h = jax.nn.relu(combined @ wa1 + ba1)
    scores = (h @ wa2.T)[..., 0] + ba2[0, 0]
    scores = scores + jnp.where(distances > bs_state[:, 4][None, :], -1e9, 0.0)
    attn_w = jax.nn.softmax(scores, axis=1)
    best = jnp.argmax(attn_w, axis=1)
    weighted_bs = bs_f[best]
    best_snr = jnp.take_along_axis(snr_db, best[:, None], axis=1)[:, 0]

    wd1 = jnp.concatenate([wd1_ue, wd1_bs, wd1_snr], axis=0)
    x = jnp.concatenate([ue_f, weighted_bs, best_snr[:, None]], axis=1)
    x = jax.nn.relu(x @ wd1 + bd1)
    x = jax.nn.relu(x @ wd2 + bd2)
    logits = x @ wc + bc
    assign = jnp.argmax(logits, axis=1) - 1
    r = jax.nn.relu(x @ wr1 + br1)
    bw_ratio = jax.nn.sigmoid(r @ wr2 + br2)[:, 0]
    bw = jnp.minimum(bw_ratio * ue_state[:, 4], ue_state[:, 4])
    return assign.astype(jnp.int32), bw


if __name__ == "__main__":
    # small shapes consistent with the module
    N_UE, N_BS = 8, 4
    UE_DIM, BS_DIM, HIDDEN = 8, 8, 32

    key = jax.random.PRNGKey(0)
    k_ue, k_bs, k_d, k_s, k_p = jax.random.split(key, 5)

    ue_state = jax.random.normal(k_ue, (N_UE, UE_DIM), jnp.float32)
    bs_state = jax.random.normal(k_bs, (N_BS, BS_DIM), jnp.float32)
    distances = jax.random.uniform(k_d, (N_UE, N_BS), jnp.float32, 0.0, 2.0)
    snr_db = jax.random.normal(k_s, (N_UE, N_BS), jnp.float32)

    params = init_params(k_p, UE_DIM, BS_DIM, HIDDEN, N_BS)

    assign, bw = allocator_forward(ue_state, bs_state, distances, snr_db, params)
    jax.block_until_ready((assign, bw))

    ref_assign, ref_bw = reference_forward(ue_state, bs_state, distances, snr_db, params)
    assert jnp.array_equal(assign, ref_assign), (assign, ref_assign)
    assert jnp.allclose(bw, ref_bw, atol=1e-4, rtol=1e-4), (bw, ref_bw)

    print("KERNEL_OK")
</pallas_src>

<mosaic_0001>
module attributes {stable_mosaic.version = 11 : i64} {
  func.func @kernel(%arg0: memref<48x128xf32, #tpu.memory_space<vmem>>, %arg1: memref<256x256xf32, #tpu.memory_space<vmem>>, %arg2: memref<8x2xf32, #tpu.memory_space<vmem>>) attributes {dimension_semantics = [], scalar_prefetch = 0 : i64, scratch_operands = 0 : i64, tpu.core_type = #tpu.core_type<tc>} {
    %c0 = arith.constant 0 : index
    %c0_0 = arith.constant 0 : index
    %0 = vector.load %arg0[%c0, %c0_0] : memref<48x128xf32, #tpu.memory_space<vmem>>, vector<16x16xf32>
    %c16 = arith.constant 16 : index
    %c0_1 = arith.constant 0 : index
    %1 = vector.load %arg0[%c16, %c0_1] : memref<48x128xf32, #tpu.memory_space<vmem>>, vector<8x4xf32>
    %c24 = arith.constant 24 : index
    %c0_2 = arith.constant 0 : index
    %2 = vector.load %arg0[%c24, %c0_2] : memref<48x128xf32, #tpu.memory_space<vmem>>, vector<1x4xf32>
    %c32 = arith.constant 32 : index
    %c0_3 = arith.constant 0 : index
    %3 = vector.load %arg0[%c32, %c0_3] : memref<48x128xf32, #tpu.memory_space<vmem>>, vector<8x4xf32>
    %c40 = arith.constant 40 : index
    %c0_4 = arith.constant 0 : index
    %4 = vector.load %arg0[%c40, %c0_4] : memref<48x128xf32, #tpu.memory_space<vmem>>, vector<8x1xf32>
    %c0_5 = arith.constant 0 : index
    %c0_6 = arith.constant 0 : index
    %5 = vector.load %arg1[%c0_5, %c0_6] : memref<256x256xf32, #tpu.memory_space<vmem>>, vector<16x32xf32>
    %cst = arith.constant dense<0.000000e+00> : vector<16x32xf32>
    %6 = tpu.matmul %0, %5, %cst {dimension_numbers = #tpu.dot_dimension_numbers<[1], [0], [0], [1], [0, 0, 1, 1], [], []>} : vector<16x16xf32>, vector<16x32xf32>, vector<16x32xf32> -> vector<16x32xf32>
    %c0_7 = arith.constant 0 : index
    %c128 = arith.constant 128 : index
    %7 = vector.load %arg1[%c0_7, %c128] : memref<256x256xf32, #tpu.memory_space<vmem>>, vector<16x32xf32>
    %8 = arith.addf %6, %7 : vector<16x32xf32>
    %cst_8 = arith.constant 0.000000e+00 : f32
    %9 = vector.broadcast %cst_8 : f32 to vector<16x32xf32>
    %10 = arith.maximumf %8, %9 : vector<16x32xf32>
    %cst_9 = arith.constant dense<0.000000e+00> : vector<16xf32>
    %11 = vector.multi_reduction <add>, %10, %cst_9 [1] : vector<16x32xf32> to vector<16xf32>
    %12 = vector.shape_cast %11 : vector<16xf32> to vector<16x1xf32>
    %13 = arith.mulf %10, %10 : vector<16x32xf32>
    %cst_10 = arith.constant dense<0.000000e+00> : vector<16xf32>
    %14 = vector.multi_reduction <add>, %13, %cst_10 [1] : vector<16x32xf32> to vector<16xf32>
    %15 = vector.shape_cast %14 : vector<16xf32> to vector<16x1xf32>
    %cst_11 = arith.constant 3.125000e-02 : f32
    %16 = vector.broadcast %cst_11 : f32 to vector<16x1xf32>
    %17 = arith.mulf %12, %16 : vector<16x1xf32>
    %cst_12 = arith.constant 3.125000e-02 : f32
    %18 = vector.broadcast %cst_12 : f32 to vector<16x1xf32>
    %19 = arith.mulf %15, %18 : vector<16x1xf32>
    %20 = arith.mulf %17, %17 : vector<16x1xf32>
    %21 = arith.subf %19, %20 : vector<16x1xf32>
    %22 = vector.broadcast %17 : vector<16x1xf32> to vector<16x32xf32>
    %23 = arith.subf %10, %22 : vector<16x32xf32>
    %cst_13 = arith.constant 9.99999974E-6 : f32
    %24 = vector.broadcast %cst_13 : f32 to vector<16x1xf32>
    %25 = arith.addf %21, %24 : vector<16x1xf32>
    %26 = math.rsqrt %25 : vector<16x1xf32>
    %27 = vector.broadcast %26 : vector<16x1xf32> to vector<16x32xf32>
    %28 = arith.mulf %23, %27 : vector<16x32xf32>
    %c16_14 = arith.constant 16 : index
    %c0_15 = arith.constant 0 : index
    %29 = vector.load %arg1[%c16_14, %c0_15] : memref<256x256xf32, #tpu.memory_space<vmem>>, vector<16x32xf32>
    %30 = arith.mulf %28, %29 : vector<16x32xf32>
    %c16_16 = arith.constant 16 : index
    %c128_17 = arith.constant 128 : index
    %31 = vector.load %arg1[%c16_16, %c128_17] : memref<256x256xf32, #tpu.memory_space<vmem>>, vector<16x32xf32>
    %32 = arith.addf %30, %31 : vector<16x32xf32>
    %33 = vector.extract_strided_slice %32 {offsets = [0, 0], sizes = [8, 32], strides = [1, 1]} : vector<16x32xf32> to vector<8x32xf32>
    %34 = vector.extract_strided_slice %32 {offsets = [8, 0], sizes = [4, 32], strides = [1, 1]} : vector<16x32xf32> to vector<4x32xf32>
    %c168 = arith.constant 168 : index
    %c0_18 = arith.constant 0 : index
    %35 = vector.load %arg1[%c168, %c0_18] : memref<256x256xf32, #tpu.memory_space<vmem>>, vector<32x160xf32>
    %cst_19 = arith.constant dense<0.000000e+00> : vector<8x160xf32>
    %36 = tpu.matmul %33, %35, %cst_19 {dimension_numbers = #tpu.dot_dimension_numbers<[1], [0], [0], [1], [0, 0, 1, 1], [], []>} : vector<8x32xf32>, vector<32x160xf32>, vector<8x160xf32> -> vector<8x160xf32>
    %37 = vector.extract_strided_slice %36 {offsets = [0, 0], sizes = [8, 128], strides = [1, 1]} : vector<8x160xf32> to vector<8x128xf32>
    %38 = vector.extract_strided_slice %36 {offsets = [0, 128], sizes = [8, 32], strides = [1, 1]} : vector<8x160xf32> to vector<8x32xf32>
    %c200 = arith.constant 200 : index
    %c0_20 = arith.constant 0 : index
    %39 = vector.load %arg1[%c200, %c0_20] : memref<256x256xf32, #tpu.memory_space<vmem>>, vector<32x160xf32>
    %cst_21 = arith.constant dense<0.000000e+00> : vector<4x160xf32>
    %40 = tpu.matmul %34, %39, %cst_21 {dimension_numbers = #tpu.dot_dimension_numbers<[1], [0], [0], [1], [0, 0, 1, 1], [], []>} : vector<4x32xf32>, vector<32x160xf32>, vector<4x160xf32> -> vector<4x160xf32>
    %41 = vector.extract_strided_slice %40 {offsets = [0, 0], sizes = [4, 128], strides = [1, 1]} : vector<4x160xf32> to vector<4x128xf32>
    %42 = vector.extract_strided_slice %40 {offsets = [0, 128], sizes = [4, 32], strides = [1, 1]} : vector<4x160xf32> to vector<4x32xf32>
    %c32_22 = arith.constant 32 : index
    %c0_23 = arith.constant 0 : index
    %43 = vector.load %arg1[%c32_22, %c0_23] : memref<256x256xf32, #tpu.memory_space<vmem>>, vector<4x128xf32>
    %44 = arith.mulf %41, %43 : vector<4x128xf32>
    %cst_24 = arith.constant dense<0.000000e+00> : vector<128xf32>
    %45 = vector.multi_reduction <add>, %44, %cst_24 [0] : vector<4x128xf32> to vector<128xf32>
    %46 = vector.shape_cast %45 : vector<128xf32> to vector<1x128xf32>
    %c32_25 = arith.constant 32 : index
    %c128_26 = arith.constant 128 : index
    %47 = vector.load %arg1[%c32_25, %c128_26] : memref<256x256xf32, #tpu.memory_space<vmem>>, vector<4x128xf32>
    %cst_27 = arith.constant dense<0.000000e+00> : vector<8x128xf32>
    %48 = tpu.matmul %3, %47, %cst_27 {dimension_numbers = #tpu.dot_dimension_numbers<[1], [0], [0], [1], [0, 0, 1, 1], [], []>} : vector<8x4xf32>, vector<4x128xf32>, vector<8x128xf32> -> vector<8x128xf32>
    %49 = vector.broadcast %46 : vector<1x128xf32> to vector<8x128xf32>
    %50 = arith.addf %37, %49 : vector<8x128xf32>
    %51 = arith.addf %50, %48 : vector<8x128xf32>
    %c40_28 = arith.constant 40 : index
    %c0_29 = arith.constant 0 : index
    %52 = vector.load %arg1[%c40_28, %c0_29] : memref<256x256xf32, #tpu.memory_space<vmem>>, vector<1x128xf32>
    %53 = vector.broadcast %52 : vector<1x128xf32> to vector<8x128xf32>
    %54 = arith.addf %51, %53 : vector<8x128xf32>
    %cst_30 = arith.constant 0.000000e+00 : f32
    %55 = vector.broadcast %cst_30 : f32 to vector<8x128xf32>
    %56 = arith.maximumf %54, %55 : vector<8x128xf32>
    %c40_31 = arith.constant 40 : index
    %c128_32 = arith.constant 128 : index
    %57 = vector.load %arg1[%c40_31, %c128_32] : memref<256x256xf32, #tpu.memory_space<vmem>>, vector<128x4xf32>
    %cst_33 = arith.constant dense<0.000000e+00> : vector<8x4xf32>
    %58 = tpu.matmul %56, %57, %cst_33 {dimension_numbers = #tpu.dot_dimension_numbers<[1], [0], [0], [1], [0, 0, 1, 1], [], []>} : vector<8x128xf32>, vector<128x4xf32>, vector<8x4xf32> -> vector<8x4xf32>
    %59 = vector.broadcast %2 : vector<1x4xf32> to vector<8x4xf32>
    %60 = arith.cmpf ogt, %1, %59 : vector<8x4xf32>
    %cst_34 = arith.constant -1.000000e+09 : f32
    %cst_35 = arith.constant 0.000000e+00 : f32
    %61 = vector.broadcast %cst_34 : f32 to vector<8x4xf32>
    %62 = vector.broadcast %cst_35 : f32 to vector<8x4xf32>
    %63 = arith.select %60, %61, %62 : vector<8x4xi1>, vector<8x4xf32>
    %64 = arith.addf %58, %63 : vector<8x4xf32>
    %65 = tpu.iota {dimensions = array<i32: 1>} : vector<8x4xi32>
    %cst_36 = arith.constant dense<0xFF800000> : vector<8xf32>
    %66 = vector.multi_reduction <maximumf>, %64, %cst_36 [1] : vector<8x4xf32> to vector<8xf32>
    %67 = vector.shape_cast %66 : vector<8xf32> to vector<8x1xf32>
    %68 = vector.broadcast %67 : vector<8x1xf32> to vector<8x4xf32>
    %69 = arith.cmpf oeq, %64, %68 : vector<8x4xf32>
    %c4_i32 = arith.constant 4 : i32
    %70 = vector.broadcast %c4_i32 : i32 to vector<8x4xi32>
    %71 = arith.select %69, %65, %70 : vector<8x4xi1>, vector<8x4xi32>
    %cst_37 = arith.constant dense<2147483647> : vector<8xi32>
    %72 = vector.multi_reduction <minsi>, %71, %cst_37 [1] : vector<8x4xi32> to vector<8xi32>
    %73 = vector.shape_cast %72 : vector<8xi32> to vector<8x1xi32>
    %74 = vector.broadcast %73 : vector<8x1xi32> to vector<8x4xi32>
    %75 = arith.cmpi eq, %65, %74 : vector<8x4xi32>
    %76 = arith.extui %75 : vector<8x4xi1> to vector<8x4xi32>
    %77 = arith.sitofp %76 : vector<8x4xi32> to vector<8x4xf32>
    %78 = arith.mulf %77, %3 : vector<8x4xf32>
    %cst_38 = arith.constant dense<0.000000e+00> : vector<8xf32>
    %79 = vector.multi_reduction <add>, %78, %cst_38 [1] : vector<8x4xf32> to vector<8xf32>
    %80 = vector.shape_cast %79 : vector<8xf32> to vector<8x1xf32>
    %cst_39 = arith.constant dense<0.000000e+00> : vector<8x32xf32>
    %81 = tpu.matmul %77, %42, %cst_39 {dimension_numbers = #tpu.dot_dimension_numbers<[1], [0], [0], [1], [0, 0, 1, 1], [], []>} : vector<8x4xf32>, vector<4x32xf32>, vector<8x32xf32> -> vector<8x32xf32>
    %82 = arith.addf %38, %81 : vector<8x32xf32>
    %c48 = arith.constant 48 : index
    %c0_40 = arith.constant 0 : index
    %83 = vector.load %arg1[%c48, %c0_40] : memref<256x256xf32, #tpu.memory_space<vmem>>, vector<1x32xf32>
    %84 = vector.broadcast %80 : vector<8x1xf32> to vector<8x32xf32>
    %85 = vector.broadcast %83 : vector<1x32xf32> to vector<8x32xf32>
    %86 = arith.mulf %84, %85 : vector<8x32xf32>
    %87 = arith.addf %82, %86 : vector<8x32xf32>
    %c56 = arith.constant 56 : index
    %c0_41 = arith.constant 0 : index
    %88 = vector.load %arg1[%c56, %c0_41] : memref<256x256xf32, #tpu.memory_space<vmem>>, vector<1x32xf32>
    %89 = vector.broadcast %88 : vector<1x32xf32> to vector<8x32xf32>
    %90 = arith.addf %87, %89 : vector<8x32xf32>
    %cst_42 = arith.constant 0.000000e+00 : f32
    %91 = vector.broadcast %cst_42 : f32 to vector<8x32xf32>
    %92 = arith.maximumf %90, %91 : vector<8x32xf32>
    %c64 = arith.constant 64 : index
    %c0_43 = arith.constant 0 : index
    %93 = vector.load %arg1[%c64, %c0_43] : memref<256x256xf32, #tpu.memory_space<vmem>>, vector<32x16xf32>
    %cst_44 = arith.constant dense<0.000000e+00> : vector<8x16xf32>
    %94 = tpu.matmul %92, %93, %cst_44 {dimension_numbers = #tpu.dot_dimension_numbers<[1], [0], [0], [1], [0, 0, 1, 1], [], []>} : vector<8x32xf32>, vector<32x16xf32>, vector<8x16xf32> -> vector<8x16xf32>
    %c96 = arith.constant 96 : index
    %c0_45 = arith.constant 0 : index
    %95 = vector.load %arg1[%c96, %c0_45] : memref<256x256xf32, #tpu.memory_space<vmem>>, vector<1x16xf32>
    %96 = vector.broadcast %95 : vector<1x16xf32> to vector<8x16xf32>
    %97 = arith.addf %94, %96 : vector<8x16xf32>
    %cst_46 = arith.constant 0.000000e+00 : f32
    %98 = vector.broadcast %cst_46 : f32 to vector<8x16xf32>
    %99 = arith.maximumf %97, %98 : vector<8x16xf32>
    %c232 = arith.constant 232 : index
    %c0_47 = arith.constant 0 : index
    %100 = vector.load %arg1[%c232, %c0_47] : memref<256x256xf32, #tpu.memory_space<vmem>>, vector<16x136xf32>
    %cst_48 = arith.constant dense<0.000000e+00> : vector<8x136xf32>
    %101 = tpu.matmul %99, %100, %cst_48 {dimension_numbers = #tpu.dot_dimension_numbers<[1], [0], [0], [1], [0, 0, 1, 1], [], []>} : vector<8x16xf32>, vector<16x136xf32>, vector<8x136xf32> -> vector<8x136xf32>
    %c248 = arith.constant 248 : index
    %c0_49 = arith.constant 0 : index
    %102 = vector.load %arg1[%c248, %c0_49] : memref<256x256xf32, #tpu.memory_space<vmem>>, vector<1x136xf32>
    %103 = vector.broadcast %102 : vector<1x136xf32> to vector<8x136xf32>
    %104 = arith.addf %101, %103 : vector<8x136xf32>
    %105 = vector.extract_strided_slice %104 {offsets = [0, 0], sizes = [8, 5], strides = [1, 1]} : vector<8x136xf32> to vector<8x5xf32>
    %106 = tpu.iota {dimensions = array<i32: 1>} : vector<8x5xi32>
    %cst_50 = arith.constant dense<0xFF800000> : vector<8xf32>
    %107 = vector.multi_reduction <maximumf>, %105, %cst_50 [1] : vector<8x5xf32> to vector<8xf32>
    %108 = vector.shape_cast %107 : vector<8xf32> to vector<8x1xf32>
    %109 = vector.broadcast %108 : vector<8x1xf32> to vector<8x5xf32>
    %110 = arith.cmpf oeq, %105, %109 : vector<8x5xf32>
    %c5_i32 = arith.constant 5 : i32
    %111 = vector.broadcast %c5_i32 : i32 to vector<8x5xi32>
    %112 = arith.select %110, %106, %111 : vector<8x5xi1>, vector<8x5xi32>
    %cst_51 = arith.constant dense<2147483647> : vector<8xi32>
    %113 = vector.multi_reduction <minsi>, %112, %cst_51 [1] : vector<8x5xi32> to vector<8xi32>
    %114 = vector.shape_cast %113 : vector<8xi32> to vector<8x1xi32>
    %c1_i32 = arith.constant 1 : i32
    %115 = vector.broadcast %c1_i32 : i32 to vector<8x1xi32>
    %116 = arith.subi %114, %115 : vector<8x1xi32>
    %117 = arith.sitofp %116 : vector<8x1xi32> to vector<8x1xf32>
    %118 = vector.extract_strided_slice %104 {offsets = [0, 128], sizes = [8, 8], strides = [1, 1]} : vector<8x136xf32> to vector<8x8xf32>
    %cst_52 = arith.constant 0.000000e+00 : f32
    %119 = vector.broadcast %cst_52 : f32 to vector<8x8xf32>
    %120 = arith.maximumf %118, %119 : vector<8x8xf32>
    %c104 = arith.constant 104 : index
    %c0_53 = arith.constant 0 : index
    %121 = vector.load %arg1[%c104, %c0_53] : memref<256x256xf32, #tpu.memory_space<vmem>>, vector<8x1xf32>
    %cst_54 = arith.constant dense<0.000000e+00> : vector<8x1xf32>
    %122 = tpu.matmul %120, %121, %cst_54 {dimension_numbers = #tpu.dot_dimension_numbers<[1], [0], [0], [1], [0, 0, 1, 1], [], []>} : vector<8x8xf32>, vector<8x1xf32>, vector<8x1xf32> -> vector<8x1xf32>
    %c112 = arith.constant 112 : index
    %c0_55 = arith.constant 0 : index
    %123 = vector.load %arg1[%c112, %c0_55] : memref<256x256xf32, #tpu.memory_space<vmem>>, vector<1x1xf32>
    %124 = vector.broadcast %123 : vector<1x1xf32> to vector<8x1xf32>
    %125 = arith.addf %122, %124 : vector<8x1xf32>
    %126 = arith.negf %125 : vector<8x1xf32>
    %127 = math.exp %126 : vector<8x1xf32>
    %cst_56 = arith.constant 1.000000e+00 : f32
    %128 = vector.broadcast %cst_56 : f32 to vector<8x1xf32>
    %129 = arith.addf %128, %127 : vector<8x1xf32>
    %130 = arith.divf %128, %129 : vector<8x1xf32>
    %131 = arith.mulf %130, %4 : vector<8x1xf32>
    %132 = arith.minimumf %131, %4 : vector<8x1xf32>
    %133 = tpu.concatenate %117, %132 in 1 : vector<8x1xf32>, vector<8x1xf32> -> vector<8x2xf32>
    %c0_57 = arith.constant 0 : index
    %c0_58 = arith.constant 0 : index
    %134 = vector.load %arg2[%c0_57, %c0_58] : memref<8x2xf32, #tpu.memory_space<vmem>>, vector<8x2xf32>
    tpu.vector_store %arg2[%c0_57, %c0_58], %133 {strides = array<i32>} : memref<8x2xf32, #tpu.memory_space<vmem>>, vector<8x2xf32>,
    return
  }
}

</mosaic_0001>

<llo_original>
// kernel: tpu_custom_call.1
$region0: #{tpu_custom_call.1}
  #allocation0 [shape = 'u32[]', space=smem, size = 0x4, offset = 0x4, fixed_abs, tag = 'smem constant byte address 0x4 - core index']
  #allocation1 [shape = 'u32[144,128]{1,0:T(1,128)}', space=vmem, size = 0x12000, scoped, tag = 'internal scratch']
  %s0 = inlined_call_operand.hbm [shape: f32[48,128], index: 0, kind: input, shape index: {}]
  %s1 = inlined_call_operand.hbm [shape: f32[256,256], index: 1, kind: input, shape index: {}]
  %s2 = inlined_call_operand.vmem [shape: f32[8,2], index: 2, kind: output, shape index: {}]
  %s3 = sld [smem:[#allocation0]]
  $region26: #{tpu_custom_call.1} parent=0
    _
  %s5 = ssub.s32 1, %s3
  %s6 = scalar_select 0, %s5, %s3
  $region1: #{tpu_custom_call.1} parent=0
    #allocation2 [shape = 'u8[24576]{0}', space=vmem, size = 0x6000, scoped, tag = 'input window, operand 0, single buffered']
    #allocation3 [shape = 's32[1]{0}', space=sflag, size = 0x4, scoped, tag = 'scoped memory for tpu_custom_call.1']
    #allocation4 [shape = 'u8[262144]{0}', space=vmem, size = 0x40000, scoped, tag = 'input window, operand 1, single buffered']
    #allocation5 [shape = 's32[1]{0}', space=sflag, size = 0x4, scoped, tag = 'scoped memory for tpu_custom_call.1']
    %7 = vsyncpa [#allocation3], 0
    %8 = vsyncpa [#allocation5], 0
    // Predicated region
    $region2: #{tpu_custom_call.1} parent=1 // pred_check
      _
    $region3: #{tpu_custom_call.1} parent=1 // pred_check_branch
      %10 = sbr.rel (0) target = $region5
    $region4: #{tpu_custom_call.1} parent=1 // pred_region
      %s12 = ssub.s32 768, 768
      %13 = vsyncadd [#allocation3], %s12
      %s14 = sshll.u32 [#allocation2], 4
      %s15 = int_to_ptr.vmem [resolvable:$true] %s14
      %20 = dma.hbm_to_vmem [thread:$0]  %s0, 768, %s15, [#allocation3], 128, 128, 8
    $region5: #{tpu_custom_call.1} parent=1 // pred_fallthru
      _
    // Predicated region
    $region6: #{tpu_custom_call.1} parent=1 // pred_check
      _
    $region7: #{tpu_custom_call.1} parent=1 // pred_check_branch
      %22 = sbr.rel (0) target = $region9
    $region8: #{tpu_custom_call.1} parent=1 // pred_region
      %s24 = ssub.s32 8192, 8192
      %25 = vsyncadd [#allocation5], %s24
      %s26 = sshll.u32 [#allocation4], 4
      %s27 = int_to_ptr.vmem [resolvable:$true] %s26
      %32 = dma.hbm_to_vmem [thread:$0]  %s1, 8192, %s27, [#allocation5], 256, 256, 16
    $region9: #{tpu_custom_call.1} parent=1 // pred_fallthru
      _
    // Predicated region
    $region10: #{tpu_custom_call.1} parent=1 // pred_check
      _
    $region11: #{tpu_custom_call.1} parent=1 // pred_check_branch
      %34 = sbr.rel (0) target = $region13
    $region12: #{tpu_custom_call.1} parent=1 // pred_region
      %35 = dma.done [#allocation3], 768
    $region13: #{tpu_custom_call.1} parent=1 // pred_fallthru
      _
    // Predicated region
    $region14: #{tpu_custom_call.1} parent=1 // pred_check
      _
    $region15: #{tpu_custom_call.1} parent=1 // pred_check_branch
      %37 = sbr.rel (0) target = $region17
    $region16: #{tpu_custom_call.1} parent=1 // pred_region
      %38 = dma.done [#allocation5], 8192
    $region17: #{tpu_custom_call.1} parent=1 // pred_fallthru
      _
    %v39 = vld [vmem:[#allocation2] sm:$0xff]
    %v40 = vld [vmem:[#allocation2 + $0x8] sm:$0xff]
    %v41 = vld [vmem:[#allocation2 + $0x10] sm:$0xff]
    %v42 = vld [vmem:[#allocation2 + $0x18] sm:$0x1]
    %v43 = vld [vmem:[#allocation2 + $0x20] sm:$0xff]
    %v44 = vld [vmem:[#allocation2 + $0x28] sm:$0xff]
    %v45 = vld [vmem:[#allocation4] sm:$0xff]
    %v46 = vld [vmem:[#allocation4 + $0x10] sm:$0xff]
    %v47 = vld [vmem:[#allocation4 + $0x8] sm:$0xff]
    %v48 = vld [vmem:[#allocation4 + $0x18] sm:$0xff]
    %vm49 = vcmask 130048
    %v51 = vsel %vm49, %v39, 0
    %v54 = vsel %vm49, %v40, 0
    %56 = vmatprep.subr.mxu0 0.0
    %57 = vmatpush1.msra.mxu0 %v45
    %58 = vmatprep.subr.mxu0 0.0
    %59 = vmatpush1.msra.mxu0 %v46
    %60 = vmatprep.subr.mxu0 0.0
    %61 = vmatpush1.msra.mxu0 0.0
    %62 = vmatprep.subr.mxu0 0.0
    %63 = vmatpush1.msra.mxu0 0.0
    %64 = vmatprep.subr.mxu0 0.0
    %65 = vmatpush1.msra.mxu0 0.0
    %66 = vmatprep.subr.mxu0 0.0
    %67 = vmatpush1.msra.mxu0 0.0
    %68 = vmatprep.subr.mxu0 0.0
    %69 = vmatpush1.msra.mxu0 0.0
    %70 = vmatprep.subr.mxu0 0.0
    %71 = vmatpush1.msra.mxu0 0.0
    %72 = vmatprep.subr.mxu0 0.0
    %73 = vmatpush1.msra.mxu0 0.0
    %74 = vmatprep.subr.mxu0 0.0
    %75 = vmatpush1.msra.mxu0 0.0
    %76 = vmatprep.subr.mxu0 0.0
    %77 = vmatpush1.msra.mxu0 0.0
    %78 = vmatprep.subr.mxu0 0.0
    %79 = vmatpush1.msra.mxu0 0.0
    %80 = vmatprep.subr.mxu0 0.0
    %81 = vmatpush1.msra.mxu0 0.0
    %82 = vmatprep.subr.mxu0 0.0
    %83 = vmatpush1.msra.mxu0 0.0
    %84 = vmatprep.subr.mxu0 0.0
    %85 = vmatpush1.msra.mxu0 0.0
    %86 = vmatprep.subr.mxu0 0.0
    %87 = vmatpush1.msra.mxu0 0.0
    %88 = vmatprep.subr.mxu0 0.0
    %89 = vmatpush1.msra.mxu0 0.0
    %90 = vmatprep.subr.mxu0 0.0
    %91 = vmatpush1.msra.mxu0 0.0
    %92 = vmatprep.subr.mxu0 0.0
    %93 = vmatpush1.msra.mxu0 0.0
    %94 = vmatprep.subr.mxu0 0.0
    %95 = vmatpush1.msra.mxu0 0.0
    %96 = vmatprep.subr.mxu0 0.0
    %97 = vmatpush1.msra.mxu0 0.0
    %98 = vmatprep.subr.mxu0 0.0
    %99 = vmatpush1.msra.mxu0 0.0
    %100 = vmatprep.subr.mxu0 0.0
    %101 = vmatpush1.msra.mxu0 0.0
    %102 = vmatprep.subr.mxu0 0.0
    %103 = vmatpush1.msra.mxu0 0.0
    %104 = vmatprep.subr.mxu0 0.0
    %105 = vmatpush1.msra.mxu0 0.0
    %106 = vmatprep.subr.mxu0 0.0
    %107 = vmatpush1.msra.mxu0 0.0
    %108 = vmatprep.subr.mxu0 0.0
    %109 = vmatpush1.msra.mxu0 0.0
    %110 = vmatprep.subr.mxu0 0.0
    %111 = vmatpush1.msra.mxu0 0.0
    %112 = vmatprep.subr.mxu0 0.0
    %113 = vmatpush1.msra.mxu0 0.0
    %114 = vmatprep.subr.mxu0 0.0
    %115 = vmatpush1.msra.mxu0 0.0
    %116 = vmatprep.subr.mxu0 0.0
    %117 = vmatpush1.msra.mxu0 0.0
    %118 = vmatprep.subr.mxu0 0.0
    %119 = vmatpush1.msra.mxu0 0.0
    %120 = vmatprep.mubr.f32.mxu0 0.0
    %121 = vmatmul.mubr.f32.gmra.mrb[0].mxu0 %v51
    %v122 = vpop.f32.mrb[0].mxu0
    %v123 = vadd.f32 %v47, %v122
    %v124 = vpop.f32.mrb[0].mxu0
    %125 = vmatprep.mubr.f32.mxu0 0.0
    %126 = vmatmul.mubr.f32.gmra.mrb[0].mxu0 %v54
    %v127 = vpop.f32.mrb[0].mxu0
    %v128 = vadd.f32 %v48, %v127
    %v129 = vpop.f32.mrb[0].mxu0
    %130 = vdwg.mxu0
    %v131 = vmax.f32 %v123, 0.0
    %v132 = vmax.f32 %v128, 0.0
    %vm133 = vcmask 261120
    %v134 = vsel %vm133, %v131, 0.0
    %135 = vadd.xlane.f32.xlu0 %v134
    %v136 = vpop.xlane.xlu0 %135
    %v137 = vsel %vm133, %v132, 0.0
    %138 = vadd.xlane.f32.xlu0 %v137
    %v139 = vpop.xlane.xlu0 %138
    %v140 = vmul.f32 %v131, %v131
    %v141 = vmul.f32 %v132, %v132
    %v142 = vsel %vm133, %v140, 0.0
    %143 = vadd.xlane.f32.xlu0 %v142
    %v144 = vpop.xlane.xlu0 %143
    %v145 = vsel %vm133, %v141, 0.0
    %146 = vadd.xlane.f32.xlu0 %v145
    %v147 = vpop.xlane.xlu0 %146
    %v148 = vmul.f32 %v136, 0.03125
    %v149 = vmul.f32 %v139, 0.03125
    %v150 = vmul.f32 %v144, 0.03125
    %v151 = vmul.f32 %v147, 0.03125
    %v152 = vmul.f32 %v148, %v148
    %v153 = vmul.f32 %v149, %v149
    %v154 = vsub.f32 %v150, %v152
    %v155 = vsub.f32 %v151, %v153
    %v156 = vsub.f32 %v131, %v148
    %v157 = vsub.f32 %v132, %v149
    %v158 = vadd.f32 %v154, 1e-05
    %v159 = vadd.f32 %v155, 1e-05
    %v160 = vrsqrt.pop %v158
    %v161 = vrsqrt.pop %v159
    %v162 = vmul.f32 %v156, %v160
    %v163 = vmul.f32 %v157, %v161
    %v164 = vld [vmem:[#allocation4 + $0x20] sm:$0xff]
    %v165 = vld [vmem:[#allocation4 + $0x30] sm:$0xff]
    %v166 = vmul.f32 %v162, %v164
    %v167 = vmul.f32 %v163, %v165
    %v168 = vld [vmem:[#allocation4 + $0x28] sm:$0xff]
    %v169 = vld [vmem:[#allocation4 + $0x38] sm:$0xff]
    %v170 = vadd.f32 %v166, %v168
    %v171 = vadd.f32 %v167, %v169
    %v172 = vld [vmem:[#allocation4 + $0x150] sm:$0xff]
    %v173 = vld [vmem:[#allocation4 + $0x158] sm:$0xff]
    %v174 = vld [vmem:[#allocation4 + $0x160] sm:$0xff]
    %v175 = vld [vmem:[#allocation4 + $0x168] sm:$0xff]
    %v176 = vld [vmem:[#allocation4 + $0x170] sm:$0xff]
    %v177 = vld [vmem:[#allocation4 + $0x178] sm:$0xff]
    %v178 = vld [vmem:[#allocation4 + $0x180] sm:$0xff]
    %v179 = vld [vmem:[#allocation4 + $0x188] sm:$0xff]
    %v181 = vsel %vm133, %v170, 0
    %183 = vmatprep.subr.mxu0 %v173
    %184 = vmatpush1.msra.mxu0 %v172
    %185 = vmatprep.subr.mxu0 %v175
    %186 = vmatpush1.msra.mxu0 %v174
    %187 = vmatprep.subr.mxu0 %v177
    %188 = vmatpush1.msra.mxu0 %v176
    %189 = vmatprep.subr.mxu0 %v179
    %190 = vmatpush1.msra.mxu0 %v178
    %191 = vmatprep.subr.mxu0 0.0
    %192 = vmatpush1.msra.mxu0 0.0
    %193 = vmatprep.subr.mxu0 0.0
    %194 = vmatpush1.msra.mxu0 0.0
    %195 = vmatprep.subr.mxu0 0.0
    %196 = vmatpush1.msra.mxu0 0.0
    %197 = vmatprep.subr.mxu0 0.0
    %198 = vmatpush1.msra.mxu0 0.0
    %199 = vmatprep.subr.mxu0 0.0
    %200 = vmatpush1.msra.mxu0 0.0
    %201 = vmatprep.subr.mxu0 0.0
    %202 = vmatpush1.msra.mxu0 0.0
    %203 = vmatprep.subr.mxu0 0.0
    %204 = vmatpush1.msra.mxu0 0.0
    %205 = vmatprep.subr.mxu0 0.0
    %206 = vmatpush1.msra.mxu0 0.0
    %207 = vmatprep.subr.mxu0 0.0
    %208 = vmatpush1.msra.mxu0 0.0
    %209 = vmatprep.subr.mxu0 0.0
    %210 = vmatpush1.msra.mxu0 0.0
    %211 = vmatprep.subr.mxu0 0.0
    %212 = vmatpush1.msra.mxu0 0.0
    %213 = vmatprep.subr.mxu0 0.0
    %214 = vmatpush1.msra.mxu0 0.0
    %215 = vmatprep.subr.mxu0 0.0
    %216 = vmatpush1.msra.mxu0 0.0
    %217 = vmatprep.subr.mxu0 0.0
    %218 = vmatpush1.msra.mxu0 0.0
    %219 = vmatprep.subr.mxu0 0.0
    %220 = vmatpush1.msra.mxu0 0.0
    %221 = vmatprep.subr.mxu0 0.0
    %222 = vmatpush1.msra.mxu0 0.0
    %223 = vmatprep.subr.mxu0 0.0
    %224 = vmatpush1.msra.mxu0 0.0
    %225 = vmatprep.subr.mxu0 0.0
    %226 = vmatpush1.msra.mxu0 0.0
    %227 = vmatprep.subr.mxu0 0.0
    %228 = vmatpush1.msra.mxu0 0.0
    %229 = vmatprep.subr.mxu0 0.0
    %230 = vmatpush1.msra.mxu0 0.0
    %231 = vmatprep.subr.mxu0 0.0
    %232 = vmatpush1.msra.mxu0 0.0
    %233 = vmatprep.subr.mxu0 0.0
    %234 = vmatpush1.msra.mxu0 0.0
    %235 = vmatprep.subr.mxu0 0.0
    %236 = vmatpush1.msra.mxu0 0.0
    %237 = vmatprep.subr.mxu0 0.0
    %238 = vmatpush1.msra.mxu0 0.0
    %239 = vmatprep.subr.mxu0 0.0
    %240 = vmatpush1.msra.mxu0 0.0
    %241 = vmatprep.subr.mxu0 0.0
    %242 = vmatpush1.msra.mxu0 0.0
    %243 = vmatprep.subr.mxu0 0.0
    %244 = vmatpush1.msra.mxu0 0.0
    %245 = vmatprep.subr.mxu0 0.0
    %246 = vmatpush1.msra.mxu0 0.0
    %247 = vmatprep.mubr.f32.mxu0 0.0
    %248 = vmatmul.mubr.f32.gmra.mrb[0].mxu0 %v181
    %v249 = vpop.f32.mrb[0].mxu0
    %v250 = vadd.f32 0.0, %v249
    %v251 = vpop.f32.mrb[0].mxu0
    %v252 = vadd.f32 0.0, %v251
    %253 = vdwg.mxu0
    %v254 = vld [vmem:[#allocation4 + $0x190] sm:$0xff]
    %v255 = vld [vmem:[#allocation4 + $0x198] sm:$0xff]
    %v256 = vld [vmem:[#allocation4 + $0x1a0] sm:$0xff]
    %v257 = vld [vmem:[#allocation4 + $0x1a8] sm:$0xff]
    %v258 = vld [vmem:[#allocation4 + $0x1b0] sm:$0xff]
    %v259 = vld [vmem:[#allocation4 + $0x1b8] sm:$0xff]
    %v260 = vld [vmem:[#allocation4 + $0x1c0] sm:$0xff]
    %v261 = vld [vmem:[#allocation4 + $0x1c8] sm:$0xff]
    %v263 = vsel %vm133, %v171, 0
    %265 = vmatprep.subr.mxu0 %v255
    %266 = vmatpush1.msra.mxu0 %v254
    %267 = vmatprep.subr.mxu0 %v257
    %268 = vmatpush1.msra.mxu0 %v256
    %269 = vmatprep.subr.mxu0 %v259
    %270 = vmatpush1.msra.mxu0 %v258
    %271 = vmatprep.subr.mxu0 %v261
    %272 = vmatpush1.msra.mxu0 %v260
    %273 = vmatprep.subr.mxu0 0.0
    %274 = vmatpush1.msra.mxu0 0.0
    %275 = vmatprep.subr.mxu0 0.0
    %276 = vmatpush1.msra.mxu0 0.0
    %277 = vmatprep.subr.mxu0 0.0
    %278 = vmatpush1.msra.mxu0 0.0
    %279 = vmatprep.subr.mxu0 0.0
    %280 = vmatpush1.msra.mxu0 0.0
    %281 = vmatprep.subr.mxu0 0.0
    %282 = vmatpush1.msra.mxu0 0.0
    %283 = vmatprep.subr.mxu0 0.0
    %284 = vmatpush1.msra.mxu0 0.0
    %285 = vmatprep.subr.mxu0 0.0
    %286 = vmatpush1.msra.mxu0 0.0
    %287 = vmatprep.subr.mxu0 0.0
    %288 = vmatpush1.msra.mxu0 0.0
    %289 = vmatprep.subr.mxu0 0.0
    %290 = vmatpush1.msra.mxu0 0.0
    %291 = vmatprep.subr.mxu0 0.0
    %292 = vmatpush1.msra.mxu0 0.0
    %293 = vmatprep.subr.mxu0 0.0
    %294 = vmatpush1.msra.mxu0 0.0
    %295 = vmatprep.subr.mxu0 0.0
    %296 = vmatpush1.msra.mxu0 0.0
    %297 = vmatprep.subr.mxu0 0.0
    %298 = vmatpush1.msra.mxu0 0.0
    %299 = vmatprep.subr.mxu0 0.0
    %300 = vmatpush1.msra.mxu0 0.0
    %301 = vmatprep.subr.mxu0 0.0
    %302 = vmatpush1.msra.mxu0 0.0
    %303 = vmatprep.subr.mxu0 0.0
    %304 = vmatpush1.msra.mxu0 0.0
    %305 = vmatprep.subr.mxu0 0.0
    %306 = vmatpush1.msra.mxu0 0.0
    %307 = vmatprep.subr.mxu0 0.0
    %308 = vmatpush1.msra.mxu0 0.0
    %309 = vmatprep.subr.mxu0 0.0
    %310 = vmatpush1.msra.mxu0 0.0
    %311 = vmatprep.subr.mxu0 0.0
    %312 = vmatpush1.msra.mxu0 0.0
    %313 = vmatprep.subr.mxu0 0.0
    %314 = vmatpush1.msra.mxu0 0.0
    %315 = vmatprep.subr.mxu0 0.0
    %316 = vmatpush1.msra.mxu0 0.0
    %317 = vmatprep.subr.mxu0 0.0
    %318 = vmatpush1.msra.mxu0 0.0
    %319 = vmatprep.subr.mxu0 0.0
    %320 = vmatpush1.msra.mxu0 0.0
    %321 = vmatprep.subr.mxu0 0.0
    %322 = vmatpush1.msra.mxu0 0.0
    %323 = vmatprep.subr.mxu0 0.0
    %324 = vmatpush1.msra.mxu0 0.0
    %325 = vmatprep.subr.mxu0 0.0
    %326 = vmatpush1.msra.mxu0 0.0
    %327 = vmatprep.subr.mxu0 0.0
    %328 = vmatpush1.msra.mxu0 0.0
    %329 = vmatprep.mubr.f32.mxu0 0.0
    %330 = vmatmul.mubr.f32.gmra.mrb[0].mxu0 %v263
    %v331 = vpop.f32.mrb[0].mxu0
    %v332 = vadd.f32 0.0, %v331
    %v333 = vpop.f32.mrb[0].mxu0
    %v334 = vadd.f32 0.0, %v333
    %335 = vdwg.mxu0
    %v336 = vld [vmem:[#allocation4 + $0x40] sm:$0xf]
    %v337 = vmul.f32 %v332, %v336
    %vm338 = vcmask 1043456
    %v339 = vsel %vm338, %v337, 0.0
    %v340 = vrot.slane %v339, 4
    %v341 = vadd.f32 %v339, %v340
    %v342 = vrot.slane %v341, 2
    %v343 = vadd.f32 %v341, %v342
    %v344 = vrot.slane %v343, 1
    %v345 = vadd.f32 %v343, %v344
    %v346 = vld [vmem:[#allocation4 + $0x48] sm:$0xf]
    %vm347 = vcmask 31744
    %v349 = vsel %vm347, %v43, 0
    %v352 = vsel %vm338, %v346, 0
    %354 = vmatprep.subr.mxu0 0.0
    %355 = vmatpush1.msra.mxu0 %v352
    %356 = vmatprep.subr.mxu0 0.0
    %357 = vmatpush1.msra.mxu0 0.0
    %358 = vmatprep.subr.mxu0 0.0
    %359 = vmatpush1.msra.mxu0 0.0
    %360 = vmatprep.subr.mxu0 0.0
    %361 = vmatpush1.msra.mxu0 0.0
    %362 = vmatprep.subr.mxu0 0.0
    %363 = vmatpush1.msra.mxu0 0.0
    %364 = vmatprep.subr.mxu0 0.0
    %365 = vmatpush1.msra.mxu0 0.0
    %366 = vmatprep.subr.mxu0 0.0
    %367 = vmatpush1.msra.mxu0 0.0
    %368 = vmatprep.subr.mxu0 0.0
    %369 = vmatpush1.msra.mxu0 0.0
    %370 = vmatprep.subr.mxu0 0.0
    %371 = vmatpush1.msra.mxu0 0.0
    %372 = vmatprep.subr.mxu0 0.0
    %373 = vmatpush1.msra.mxu0 0.0
    %374 = vmatprep.subr.mxu0 0.0
    %375 = vmatpush1.msra.mxu0 0.0
    %376 = vmatprep.subr.mxu0 0.0
    %377 = vmatpush1.msra.mxu0 0.0
    %378 = vmatprep.subr.mxu0 0.0
    %379 = vmatpush1.msra.mxu0 0.0
    %380 = vmatprep.subr.mxu0 0.0
    %381 = vmatpush1.msra.mxu0 0.0
    %382 = vmatprep.subr.mxu0 0.0
    %383 = vmatpush1.msra.mxu0 0.0
    %384 = vmatprep.subr.mxu0 0.0
    %385 = vmatpush1.msra.mxu0 0.0
    %386 = vmatprep.subr.mxu0 0.0
    %387 = vmatpush1.msra.mxu0 0.0
    %388 = vmatprep.subr.mxu0 0.0
    %389 = vmatpush1.msra.mxu0 0.0
    %390 = vmatprep.subr.mxu0 0.0
    %391 = vmatpush1.msra.mxu0 0.0
    %392 = vmatprep.subr.mxu0 0.0
    %393 = vmatpush1.msra.mxu0 0.0
    %394 = vmatprep.subr.mxu0 0.0
    %395 = vmatpush1.msra.mxu0 0.0
    %396 = vmatprep.subr.mxu0 0.0
    %397 = vmatpush1.msra.mxu0 0.0
    %398 = vmatprep.subr.mxu0 0.0
    %399 = vmatpush1.msra.mxu0 0.0
    %400 = vmatprep.subr.mxu0 0.0
    %401 = vmatpush1.msra.mxu0 0.0
    %402 = vmatprep.subr.mxu0 0.0
    %403 = vmatpush1.msra.mxu0 0.0
    %404 = vmatprep.subr.mxu0 0.0
    %405 = vmatpush1.msra.mxu0 0.0
    %406 = vmatprep.subr.mxu0 0.0
    %407 = vmatpush1.msra.mxu0 0.0
    %408 = vmatprep.subr.mxu0 0.0
    %409 = vmatpush1.msra.mxu0 0.0
    %410 = vmatprep.subr.mxu0 0.0
    %411 = vmatpush1.msra.mxu0 0.0
    %412 = vmatprep.subr.mxu0 0.0
    %413 = vmatpush1.msra.mxu0 0.0
    %414 = vmatprep.subr.mxu0 0.0
    %415 = vmatpush1.msra.mxu0 0.0
    %416 = vmatprep.subr.mxu0 0.0
    %417 = vmatpush1.msra.mxu0 0.0
    %418 = vmatprep.mubr.f32.mxu0 0.0
    %419 = vmatmul.mubr.f32.gmra.mrb[0].mxu0 %v349
    %v420 = vpop.f32.mrb[0].mxu0
    %v421 = vadd.f32 0.0, %v420
    %v422 = vpop.f32.mrb[0].mxu0
    %423 = vdwg.mxu0
    %v424 = vadd.f32 %v250, %v345
    %v425 = vadd.f32 %v424, %v421
    %v426 = vld [vmem:[#allocation4 + $0x50] ss:$0 sm:$0xff]
    %v427 = vadd.f32 %v425, %v426
    %v428 = vmax.f32 %v427, 0.0
    %v429 = vld [vmem:[#allocation4 + $0x58] sm:$0xff]
    %v430 = vld [vmem:[#allocation4 + $0x68] sm:$0xff]
    %v431 = vld [vmem:[#allocation4 + $0x78] sm:$0xff]
    %v432 = vld [vmem:[#allocation4 + $0x88] sm:$0xff]
    %v433 = vld [vmem:[#allocation4 + $0x98] sm:$0xff]
    %v434 = vld [vmem:[#allocation4 + $0xa8] sm:$0xff]
    %v435 = vld [vmem:[#allocation4 + $0xb8] sm:$0xff]
    %v436 = vld [vmem:[#allocation4 + $0xc8] sm:$0xff]
    %v437 = vld [vmem:[#allocation4 + $0xd8] sm:$0xff]
    %v438 = vld [vmem:[#allocation4 + $0xe8] sm:$0xff]
    %v439 = vld [vmem:[#allocation4 + $0xf8] sm:$0xff]
    %v440 = vld [vmem:[#allocation4 + $0x108] sm:$0xff]
    %v441 = vld [vmem:[#allocation4 + $0x118] sm:$0xff]
    %v442 = vld [vmem:[#allocation4 + $0x128] sm:$0xff]
    %v443 = vld [vmem:[#allocation4 + $0x138] sm:$0xff]
    %v444 = vld [vmem:[#allocation4 + $0x148] sm:$0xff]
    %v445 = vlaneseq
    %v446 = vshrl.u32 %v445, 7
    %v447 = vsub.s32 0, %v446
    %v448 = vrot.slane %v42, %v447
    %vm449 = vcmp.gt.f32.partialorder %v41, %v448
    %v450 = vsel %vm449, -1e+09, 0.0
    %451 = vmatprep.subr.mxu0 0.0
    %452 = vmatpush1.msra.mxu0 %v429
    %453 = vmatprep.subr.mxu0 0.0
    %454 = vmatpush1.msra.mxu0 %v430
    %455 = vmatprep.subr.mxu0 0.0
    %456 = vmatpush1.msra.mxu0 %v431
    %457 = vmatprep.subr.mxu0 0.0
    %458 = vmatpush1.msra.mxu0 %v432
    %459 = vmatprep.subr.mxu0 0.0
    %460 = vmatpush1.msra.mxu0 %v433
    %461 = vmatprep.subr.mxu0 0.0
    %462 = vmatpush1.msra.mxu0 %v434
    %463 = vmatprep.subr.mxu0 0.0
    %464 = vmatpush1.msra.mxu0 %v435
    %465 = vmatprep.subr.mxu0 0.0
    %466 = vmatpush1.msra.mxu0 %v436
    %467 = vmatprep.subr.mxu0 0.0
    %468 = vmatpush1.msra.mxu0 %v437
    %469 = vmatprep.subr.mxu0 0.0
    %470 = vmatpush1.msra.mxu0 %v438
    %471 = vmatprep.subr.mxu0 0.0
    %472 = vmatpush1.msra.mxu0 %v439
    %473 = vmatprep.subr.mxu0 0.0
    %474 = vmatpush1.msra.mxu0 %v440
    %475 = vmatprep.subr.mxu0 0.0
    %476 = vmatpush1.msra.mxu0 %v441
    %477 = vmatprep.subr.mxu0 0.0
    %478 = vmatpush1.msra.mxu0 %v442
    %479 = vmatprep.subr.mxu0 0.0
    %480 = vmatpush1.msra.mxu0 %v443
    %481 = vmatprep.subr.mxu0 0.0
    %482 = vmatpush1.msra.mxu0 %v444
    %483 = vmatprep.subr.mxu0 0.0
    %484 = vmatpush1.msra.mxu0 0.0
    %485 = vmatprep.subr.mxu0 0.0
    %486 = vmatpush1.msra.mxu0 0.0
    %487 = vmatprep.subr.mxu0 0.0
    %488 = vmatpush1.msra.mxu0 0.0
    %489 = vmatprep.subr.mxu0 0.0
    %490 = vmatpush1.msra.mxu0 0.0
    %491 = vmatprep.subr.mxu0 0.0
    %492 = vmatpush1.msra.mxu0 0.0
    %493 = vmatprep.subr.mxu0 0.0
    %494 = vmatpush1.msra.mxu0 0.0
    %495 = vmatprep.subr.mxu0 0.0
    %496 = vmatpush1.msra.mxu0 0.0
    %497 = vmatprep.subr.mxu0 0.0
    %498 = vmatpush1.msra.mxu0 0.0
    %499 = vmatprep.subr.mxu0 0.0
    %500 = vmatpush1.msra.mxu0 0.0
    %501 = vmatprep.subr.mxu0 0.0
    %502 = vmatpush1.msra.mxu0 0.0
    %503 = vmatprep.subr.mxu0 0.0
    %504 = vmatpush1.msra.mxu0 0.0
    %505 = vmatprep.subr.mxu0 0.0
    %506 = vmatpush1.msra.mxu0 0.0
    %507 = vmatprep.subr.mxu0 0.0
    %508 = vmatpush1.msra.mxu0 0.0
    %509 = vmatprep.subr.mxu0 0.0
    %510 = vmatpush1.msra.mxu0 0.0
    %511 = vmatprep.subr.mxu0 0.0
    %512 = vmatpush1.msra.mxu0 0.0
    %513 = vmatprep.subr.mxu0 0.0
    %514 = vmatpush1.msra.mxu0 0.0
    %515 = vmatprep.mubr.f32.mxu0 0.0
    %516 = vmatmul.mubr.f32.gmra.mrb[0].mxu0 %v428
    %v517 = vpop.f32.mrb[0].mxu0
    %v518 = vadd.f32 %v450, %v517
    %v519 = vpop.f32.mrb[0].mxu0
    %520 = vdwg.mxu0
    %v521 = vlaneseq
    %v522 = vand.u32 %v521, 127
    %v523 = vsel %vm347, %v518, -inf
    %524 = vmax.xlane.f32.xlu0 %v523
    %v525 = vpop.xlane.xlu0 %524
    %vm526 = vcmp.eq.f32.partialorder %v518, %v525
    %v527 = vsel %vm526, %v522, 4
    %v528 = vsel %vm347, %v527, 2147483647
    %v529 = vand.u32 %v528, 65535
    %v530 = vshra.s32 %v528, 16
    %v531 = vcvt.s32.f32 %v529
    %v532 = vcvt.s32.f32 %v530
    %533 = vmin.xlane.f32.xlu0 %v532
    %v534 = vpop.xlane.xlu0 %533
    %vm535 = vcmp.eq.f32.partialorder %v532, %v534
    %v536 = vsel %vm535, %v531, inf
    %537 = vmin.xlane.f32.xlu0 %v536
    %v538 = vpop.xlane.xlu0 %537
    %v539 = vcvt.f32.s32 %v538
    %v540 = vcvt.f32.s32 %v534
    %v541 = vshll.u32 %v540, 16
    %v542 = vadd.s32 %v541, %v539
    %vm543 = vcmp.eq.s32.totalorder %v522, %v542
    %v544 = vsel %vm543, 1, 0
    %v545 = vcvt.s32.f32 %v544
    %v546 = vmul.f32 %v545, %v43
    %v547 = vsel %vm347, %v546, 0.0
    %548 = vadd.xlane.f32.xlu0 %v547
    %v549 = vpop.xlane.xlu0 %548
    %v551 = vsel %vm347, %v545, 0
    %v554 = vsel %vm338, %v334, 0
    %556 = vmatprep.subr.mxu0 0.0
    %557 = vmatpush1.msra.mxu0 %v554
    %558 = vmatprep.subr.mxu0 0.0
    %559 = vmatpush1.msra.mxu0 0.0
    %560 = vmatprep.subr.mxu0 0.0
    %561 = vmatpush1.msra.mxu0 0.0
    %562 = vmatprep.subr.mxu0 0.0
    %563 = vmatpush1.msra.mxu0 0.0
    %564 = vmatprep.subr.mxu0 0.0
    %565 = vmatpush1.msra.mxu0 0.0
    %566 = vmatprep.subr.mxu0 0.0
    %567 = vmatpush1.msra.mxu0 0.0
    %568 = vmatprep.subr.mxu0 0.0
    %569 = vmatpush1.msra.mxu0 0.0
    %570 = vmatprep.subr.mxu0 0.0
    %571 = vmatpush1.msra.mxu0 0.0
    %572 = vmatprep.subr.mxu0 0.0
    %573 = vmatpush1.msra.mxu0 0.0
    %574 = vmatprep.subr.mxu0 0.0
    %575 = vmatpush1.msra.mxu0 0.0
    %576 = vmatprep.subr.mxu0 0.0
    %577 = vmatpush1.msra.mxu0 0.0
    %578 = vmatprep.subr.mxu0 0.0
    %579 = vmatpush1.msra.mxu0 0.0
    %580 = vmatprep.subr.mxu0 0.0
    %581 = vmatpush1.msra.mxu0 0.0
    %582 = vmatprep.subr.mxu0 0.0
    %583 = vmatpush1.msra.mxu0 0.0
    %584 = vmatprep.subr.mxu0 0.0
    %585 = vmatpush1.msra.mxu0 0.0
    %586 = vmatprep.subr.mxu0 0.0
    %587 = vmatpush1.msra.mxu0 0.0
    %588 = vmatprep.subr.mxu0 0.0
    %589 = vmatpush1.msra.mxu0 0.0
    %590 = vmatprep.subr.mxu0 0.0
    %591 = vmatpush1.msra.mxu0 0.0
    %592 = vmatprep.subr.mxu0 0.0
    %593 = vmatpush1.msra.mxu0 0.0
    %594 = vmatprep.subr.mxu0 0.0
    %595 = vmatpush1.msra.mxu0 0.0
    %596 = vmatprep.subr.mxu0 0.0
    %597 = vmatpush1.msra.mxu0 0.0
    %598 = vmatprep.subr.mxu0 0.0
    %599 = vmatpush1.msra.mxu0 0.0
    %600 = vmatprep.subr.mxu0 0.0
    %601 = vmatpush1.msra.mxu0 0.0
    %602 = vmatprep.subr.mxu0 0.0
    %603 = vmatpush1.msra.mxu0 0.0
    %604 = vmatprep.subr.mxu0 0.0
    %605 = vmatpush1.msra.mxu0 0.0
    %606 = vmatprep.subr.mxu0 0.0
    %607 = vmatpush1.msra.mxu0 0.0
    %608 = vmatprep.subr.mxu0 0.0
    %609 = vmatpush1.msra.mxu0 0.0
    %610 = vmatprep.subr.mxu0 0.0
    %611 = vmatpush1.msra.mxu0 0.0
    %612 = vmatprep.subr.mxu0 0.0
    %613 = vmatpush1.msra.mxu0 0.0
    %614 = vmatprep.subr.mxu0 0.0
    %615 = vmatpush1.msra.mxu0 0.0
    %616 = vmatprep.subr.mxu0 0.0
    %617 = vmatpush1.msra.mxu0 0.0
    %618 = vmatprep.subr.mxu0 0.0
    %619 = vmatpush1.msra.mxu0 0.0
    %620 = vmatprep.mubr.f32.mxu0 0.0
    %621 = vmatmul.mubr.f32.gmra.mrb[0].mxu0 %v551
    %v622 = vpop.f32.mrb[0].mxu0
    %v623 = vadd.f32 0.0, %v622
    %v624 = vpop.f32.mrb[0].mxu0
    %625 = vdwg.mxu0
    %v626 = vadd.f32 %v252, %v623
    %v627 = vld [vmem:[#allocation4 + $0x60] ss:$0 sm:$0xff]
    %v628 = vmul.f32 %v549, %v627
    %v629 = vadd.f32 %v626, %v628
    %v630 = vld [vmem:[#allocation4 + $0x70] ss:$0 sm:$0xff]
    %v631 = vadd.f32 %v629, %v630
    %v632 = vmax.f32 %v631, 0.0
    %v633 = vld [vmem:[#allocation4 + $0x80] sm:$0xff]
    %v634 = vld [vmem:[#allocation4 + $0x90] sm:$0xff]
    %v635 = vld [vmem:[#allocation4 + $0xa0] sm:$0xff]
    %v636 = vld [vmem:[#allocation4 + $0xb0] sm:$0xff]
    %v637 = vld [vmem:[#allocation4 + $0xc0] ss:$0 sm:$0xff]
    %v639 = vsel %vm133, %v632, 0
    %641 = vmatprep.subr.mxu0 0.0
    %642 = vmatpush1.msra.mxu0 %v633
    %643 = vmatprep.subr.mxu0 0.0
    %644 = vmatpush1.msra.mxu0 %v634
    %645 = vmatprep.subr.mxu0 0.0
    %646 = vmatpush1.msra.mxu0 %v635
    %647 = vmatprep.subr.mxu0 0.0
    %648 = vmatpush1.msra.mxu0 %v636
    %649 = vmatprep.subr.mxu0 0.0
    %650 = vmatpush1.msra.mxu0 0.0
    %651 = vmatprep.subr.mxu0 0.0
    %652 = vmatpush1.msra.mxu0 0.0
    %653 = vmatprep.subr.mxu0 0.0
    %654 = vmatpush1.msra.mxu0 0.0
    %655 = vmatprep.subr.mxu0 0.0
    %656 = vmatpush1.msra.mxu0 0.0
    %657 = vmatprep.subr.mxu0 0.0
    %658 = vmatpush1.msra.mxu0 0.0
    %659 = vmatprep.subr.mxu0 0.0
    %660 = vmatpush1.msra.mxu0 0.0
    %661 = vmatprep.subr.mxu0 0.0
    %662 = vmatpush1.msra.mxu0 0.0
    %663 = vmatprep.subr.mxu0 0.0
    %664 = vmatpush1.msra.mxu0 0.0
    %665 = vmatprep.subr.mxu0 0.0
    %666 = vmatpush1.msra.mxu0 0.0
    %667 = vmatprep.subr.mxu0 0.0
    %668 = vmatpush1.msra.mxu0 0.0
    %669 = vmatprep.subr.mxu0 0.0
    %670 = vmatpush1.msra.mxu0 0.0
    %671 = vmatprep.subr.mxu0 0.0
    %672 = vmatpush1.msra.mxu0 0.0
    %673 = vmatprep.subr.mxu0 0.0
    %674 = vmatpush1.msra.mxu0 0.0
    %675 = vmatprep.subr.mxu0 0.0
    %676 = vmatpush1.msra.mxu0 0.0
    %677 = vmatprep.subr.mxu0 0.0
    %678 = vmatpush1.msra.mxu0 0.0
    %679 = vmatprep.subr.mxu0 0.0
    %680 = vmatpush1.msra.mxu0 0.0
    %681 = vmatprep.subr.mxu0 0.0
    %682 = vmatpush1.msra.mxu0 0.0
    %683 = vmatprep.subr.mxu0 0.0
    %684 = vmatpush1.msra.mxu0 0.0
    %685 = vmatprep.subr.mxu0 0.0
    %686 = vmatpush1.msra.mxu0 0.0
    %687 = vmatprep.subr.mxu0 0.0
    %688 = vmatpush1.msra.mxu0 0.0
    %689 = vmatprep.subr.mxu0 0.0
    %690 = vmatpush1.msra.mxu0 0.0
    %691 = vmatprep.subr.mxu0 0.0
    %692 = vmatpush1.msra.mxu0 0.0
    %693 = vmatprep.subr.mxu0 0.0
    %694 = vmatpush1.msra.mxu0 0.0
    %695 = vmatprep.subr.mxu0 0.0
    %696 = vmatpush1.msra.mxu0 0.0
    %697 = vmatprep.subr.mxu0 0.0
    %698 = vmatpush1.msra.mxu0 0.0
    %699 = vmatprep.subr.mxu0 0.0
    %700 = vmatpush1.msra.mxu0 0.0
    %701 = vmatprep.subr.mxu0 0.0
    %702 = vmatpush1.msra.mxu0 0.0
    %703 = vmatprep.subr.mxu0 0.0
    %704 = vmatpush1.msra.mxu0 0.0
    %705 = vmatprep.mubr.f32.mxu0 0.0
    %706 = vmatmul.mubr.f32.gmra.mrb[0].mxu0 %v639
    %v707 = vpop.f32.mrb[0].mxu0
    %v708 = vadd.f32 %v637, %v707
    %v709 = vpop.f32.mrb[0].mxu0
    %710 = vdwg.mxu0
    %v711 = vmax.f32 %v708, 0.0
    %v712 = vld [vmem:[#allocation4 + $0x1d0] sm:$0xff]
    %v713 = vld [vmem:[#allocation4 + $0x1d8] sm:$0xff]
    %v714 = vld [vmem:[#allocation4 + $0x1e0] sm:$0xff]
    %v715 = vld [vmem:[#allocation4 + $0x1e8] sm:$0xff]
    %s716 = scalar_lea.vmem [#allocation4], 496
    %v717 = vld [vmem:[%s716] ss:$8 sm:$0x3]
    %v719 = vlaneseq
    %v720 = vshrl.u32 %v719, 7
    %v721 = vsub.s32 0, %v720
    %v722 = vrot.slane %v717, %v721
    %v723 = vlaneseq
    %v724 = vshrl.u32 %v723, 7
    %v725 = vsub.s32 1, %v724
    %v726 = vrot.slane %v717, %v725
    %v730 = vsel %vm49, %v711, 0
    %732 = vmatprep.subr.mxu0 %v713
    %733 = vmatpush1.msra.mxu0 %v712
    %734 = vmatprep.subr.mxu0 %v715
    %735 = vmatpush1.msra.mxu0 %v714
    %736 = vmatprep.subr.mxu0 0.0
    %737 = vmatpush1.msra.mxu0 0.0
    %738 = vmatprep.subr.mxu0 0.0
    %739 = vmatpush1.msra.mxu0 0.0
    %740 = vmatprep.subr.mxu0 0.0
    %741 = vmatpush1.msra.mxu0 0.0
    %742 = vmatprep.subr.mxu0 0.0
    %743 = vmatpush1.msra.mxu0 0.0
    %744 = vmatprep.subr.mxu0 0.0
    %745 = vmatpush1.msra.mxu0 0.0
    %746 = vmatprep.subr.mxu0 0.0
    %747 = vmatpush1.msra.mxu0 0.0
    %748 = vmatprep.subr.mxu0 0.0
    %749 = vmatpush1.msra.mxu0 0.0
    %750 = vmatprep.subr.mxu0 0.0
    %751 = vmatpush1.msra.mxu0 0.0
    %752 = vmatprep.subr.mxu0 0.0
    %753 = vmatpush1.msra.mxu0 0.0
    %754 = vmatprep.subr.mxu0 0.0
    %755 = vmatpush1.msra.mxu0 0.0
    %756 = vmatprep.subr.mxu0 0.0
    %757 = vmatpush1.msra.mxu0 0.0
    %758 = vmatprep.subr.mxu0 0.0
    %759 = vmatpush1.msra.mxu0 0.0
    %760 = vmatprep.subr.mxu0 0.0
    %761 = vmatpush1.msra.mxu0 0.0
    %762 = vmatprep.subr.mxu0 0.0
    %763 = vmatpush1.msra.mxu0 0.0
    %764 = vmatprep.subr.mxu0 0.0
    %765 = vmatpush1.msra.mxu0 0.0
    %766 = vmatprep.subr.mxu0 0.0
    %767 = vmatpush1.msra.mxu0 0.0
    %768 = vmatprep.subr.mxu0 0.0
    %769 = vmatpush1.msra.mxu0 0.0
    %770 = vmatprep.subr.mxu0 0.0
    %771 = vmatpush1.msra.mxu0 0.0
    %772 = vmatprep.subr.mxu0 0.0
    %773 = vmatpush1.msra.mxu0 0.0
    %774 = vmatprep.subr.mxu0 0.0
    %775 = vmatpush1.msra.mxu0 0.0
    %776 = vmatprep.subr.mxu0 0.0
    %777 = vmatpush1.msra.mxu0 0.0
    %778 = vmatprep.subr.mxu0 0.0
    %779 = vmatpush1.msra.mxu0 0.0
    %780 = vmatprep.subr.mxu0 0.0
    %781 = vmatpush1.msra.mxu0 0.0
    %782 = vmatprep.subr.mxu0 0.0
    %783 = vmatpush1.msra.mxu0 0.0
    %784 = vmatprep.subr.mxu0 0.0
    %785 = vmatpush1.msra.mxu0 0.0
    %786 = vmatprep.subr.mxu0 0.0
    %787 = vmatpush1.msra.mxu0 0.0
    %788 = vmatprep.subr.mxu0 0.0
    %789 = vmatpush1.msra.mxu0 0.0
    %790 = vmatprep.subr.mxu0 0.0
    %791 = vmatpush1.msra.mxu0 0.0
    %792 = vmatprep.subr.mxu0 0.0
    %793 = vmatpush1.msra.mxu0 0.0
    %794 = vmatprep.subr.mxu0 0.0
    %795 = vmatpush1.msra.mxu0 0.0
    %796 = vmatprep.mubr.f32.mxu0 0.0
    %797 = vmatmul.mubr.f32.gmra.mrb[0].mxu0 %v730
    %v798 = vpop.f32.mrb[0].mxu0
    %v799 = vadd.f32 %v722, %v798
    %v800 = vpop.f32.mrb[0].mxu0
    %v801 = vadd.f32 %v726, %v800
    %802 = vdwg.mxu0
    %vm803 = vcmask 39936
    %v804 = vsel %vm803, %v799, -inf
    %805 = vmax.xlane.f32.xlu0 %v804
    %v806 = vpop.xlane.xlu0 %805
    %vm807 = vcmp.eq.f32.partialorder %v799, %v806
    %v808 = vsel %vm807, %v522, 5
    %v809 = vsel %vm803, %v808, 2147483647
    %v810 = vand.u32 %v809, 65535
    %v811 = vshra.s32 %v809, 16
    %v812 = vcvt.s32.f32 %v810
    %v813 = vcvt.s32.f32 %v811
    %814 = vmin.xlane.f32.xlu0 %v813
    %v815 = vpop.xlane.xlu0 %814
    %vm816 = vcmp.eq.f32.partialorder %v813, %v815
    %v817 = vsel %vm816, %v812, inf
    %818 = vmin.xlane.f32.xlu0 %v817
    %v819 = vpop.xlane.xlu0 %818
    %v820 = vcvt.f32.s32 %v819
    %v821 = vcvt.f32.s32 %v815
    %v822 = vshll.u32 %v821, 16
    %v823 = vadd.s32 %v822, %v820
    %v824 = vsub.s32 %v823, 1
    %v825 = vcvt.s32.f32 %v824
    %v826 = vmax.f32 %v801, 0.0
    %v827 = vld [vmem:[#allocation4 + $0xd0] sm:$0xff]
    %v828 = vld [vmem:[#allocation4 + $0xe0] ss:$0 sm:$0xff]
    %vm829 = vcmask 64512
    %v831 = vsel %vm829, %v826, 0
    %833 = vmatprep.subr.mxu0 0.0
    %834 = vmatpush1.msra.mxu0 %v827
    %835 = vmatprep.subr.mxu0 0.0
    %836 = vmatpush1.msra.mxu0 0.0
    %837 = vmatprep.subr.mxu0 0.0
    %838 = vmatpush1.msra.mxu0 0.0
    %839 = vmatprep.subr.mxu0 0.0
    %840 = vmatpush1.msra.mxu0 0.0
    %841 = vmatprep.subr.mxu0 0.0
    %842 = vmatpush1.msra.mxu0 0.0
    %843 = vmatprep.subr.mxu0 0.0
    %844 = vmatpush1.msra.mxu0 0.0
    %845 = vmatprep.subr.mxu0 0.0
    %846 = vmatpush1.msra.mxu0 0.0
    %847 = vmatprep.subr.mxu0 0.0
    %848 = vmatpush1.msra.mxu0 0.0
    %849 = vmatprep.subr.mxu0 0.0
    %850 = vmatpush1.msra.mxu0 0.0
    %851 = vmatprep.subr.mxu0 0.0
    %852 = vmatpush1.msra.mxu0 0.0
    %853 = vmatprep.subr.mxu0 0.0
    %854 = vmatpush1.msra.mxu0 0.0
    %855 = vmatprep.subr.mxu0 0.0
    %856 = vmatpush1.msra.mxu0 0.0
    %857 = vmatprep.subr.mxu0 0.0
    %858 = vmatpush1.msra.mxu0 0.0
    %859 = vmatprep.subr.mxu0 0.0
    %860 = vmatpush1.msra.mxu0 0.0
    %861 = vmatprep.subr.mxu0 0.0
    %862 = vmatpush1.msra.mxu0 0.0
    %863 = vmatprep.subr.mxu0 0.0
    %864 = vmatpush1.msra.mxu0 0.0
    %865 = vmatprep.subr.mxu0 0.0
    %866 = vmatpush1.msra.mxu0 0.0
    %867 = vmatprep.subr.mxu0 0.0
    %868 = vmatpush1.msra.mxu0 0.0
    %869 = vmatprep.subr.mxu0 0.0
    %870 = vmatpush1.msra.mxu0 0.0
    %871 = vmatprep.subr.mxu0 0.0
    %872 = vmatpush1.msra.mxu0 0.0
    %873 = vmatprep.subr.mxu0 0.0
    %874 = vmatpush1.msra.mxu0 0.0
    %875 = vmatprep.subr.mxu0 0.0
    %876 = vmatpush1.msra.mxu0 0.0
    %877 = vmatprep.subr.mxu0 0.0
    %878 = vmatpush1.msra.mxu0 0.0
    %879 = vmatprep.subr.mxu0 0.0
    %880 = vmatpush1.msra.mxu0 0.0
    %881 = vmatprep.subr.mxu0 0.0
    %882 = vmatpush1.msra.mxu0 0.0
    %883 = vmatprep.subr.mxu0 0.0
    %884 = vmatpush1.msra.mxu0 0.0
    %885 = vmatprep.subr.mxu0 0.0
    %886 = vmatpush1.msra.mxu0 0.0
    %887 = vmatprep.subr.mxu0 0.0
    %888 = vmatpush1.msra.mxu0 0.0
    %889 = vmatprep.subr.mxu0 0.0
    %890 = vmatpush1.msra.mxu0 0.0
    %891 = vmatprep.subr.mxu0 0.0
    %892 = vmatpush1.msra.mxu0 0.0
    %893 = vmatprep.subr.mxu0 0.0
    %894 = vmatpush1.msra.mxu0 0.0
    %895 = vmatprep.subr.mxu0 0.0
    %896 = vmatpush1.msra.mxu0 0.0
    %897 = vmatprep.mubr.f32.mxu0 0.0
    %898 = vmatmul.mubr.f32.gmra.mrb[0].mxu0 %v831
    %v899 = vpop.f32.mrb[0].mxu0
    %v900 = vadd.f32 %v828, %v899
    %v901 = vpop.f32.mrb[0].mxu0
    %902 = vdwg.mxu0
    %v903 = vxor.u32 %v900, 2147483648
    %v904 = vmul.f32 %v903, 1.442695
    %v905 = vpow.pop %v904
    %v906 = vadd.f32 %v905, 1.0
    %v907 = vrcp.pop %v906
    %v908 = vmul.f32 1.0, %v907
    %v909 = vmul.f32 %v908, %v44
    %v910 = vmin.f32 %v909, %v44
    %912 = vrot.lane.b32.xlu0 %v910, 1
    %v913 = vpop.permute.xlu0 %912
    %vm915 = vcmask 7168
    %v916 = vsel %vm915, %v825, %v913
    %vm917 = vcmask 15360
    %918 = vst.msk [vmem:[%s2] sm:$0xff] %vm917, %v916
    // Predicated region
    $region18: #{tpu_custom_call.1} parent=1 // pred_check
      _
    $region19: #{tpu_custom_call.1} parent=1 // pred_check_branch
      %920 = sbr.rel (0) target = $region21
    $region20: #{tpu_custom_call.1} parent=1 // pred_region
      _
    $region21: #{tpu_custom_call.1} parent=1 // pred_fallthru
      _
    // Predicated region
    $region22: #{tpu_custom_call.1} parent=1 // pred_check
      _
    $region23: #{tpu_custom_call.1} parent=1 // pred_check_branch
      %922 = sbr.rel (0) target = $region25
    $region24: #{tpu_custom_call.1} parent=1 // pred_region
      _
    $region25: #{tpu_custom_call.1} parent=1 // pred_fallthru
      _
    %923 = vsyncpa [#allocation3], 1
    %924 = vsyncpa [#allocation5], 1

</llo_original>
